<compile_context>
chip_gen: v5e
topology: v5e:2x2
jax: 0.10.0
libtpu: 0.0.40
codegen_flags: <defaults>
</compile_context>

<pallas_src>
import functools

import jax
import jax.numpy as jnp
import numpy as np
from jax.experimental import pallas as pl
from jax.experimental.pallas import tpu as pltpu


def mha_kernel(x_ref, wqkv_ref, bqkv_ref, wproj_ref, bproj_ref, o_ref, acc_ref,
               *, head_dim, group):
    hg = pl.program_id(1)
    num_groups = pl.num_programs(1)
    D = head_dim
    G = group
    GD = G * D

    # --- grouped QKV projection: one MXU matmul covers G heads (bf16 feeds, f32 acc) ---
    x = x_ref[0]                                                  # (N, E)  bf16 (pre-cast)
    w = wqkv_ref[hg]                                              # (E, 3*G*D) bf16, VMEM-resident
    qkv = jnp.dot(x, w, preferred_element_type=jnp.float32) + bqkv_ref[hg]   # (N, 3GD) f32

    # Per-head attention within the group (attention scale already folded into q offline).
    ctx_heads = []
    for g in range(G):
        q = qkv[:, g * D:(g + 1) * D]                             # (N, D)
        k = qkv[:, GD + g * D:GD + (g + 1) * D]                   # (N, D)
        v = qkv[:, 2 * GD + g * D:2 * GD + (g + 1) * D]           # (N, D)

        att = jnp.einsum('nd,md->nm', q.astype(jnp.bfloat16), k.astype(jnp.bfloat16),
                         preferred_element_type=jnp.float32)      # (N, N) f32
        att = jnp.exp(att - jnp.max(att, axis=-1, keepdims=True))
        denom = jnp.sum(att, axis=-1, keepdims=True)              # (N, 1)
        # TODO(synk): att_drop (Dropout p=0.1) implemented as identity (eval-mode forward).
        ctx = jnp.dot(att.astype(jnp.bfloat16), v.astype(jnp.bfloat16),
                      preferred_element_type=jnp.float32)         # (N, D) f32
        # Deferred softmax normalization: scale the (N, D) context, not the (N, N) probs.
        ctx_heads.append(ctx * pl.reciprocal(denom, approx=True))

    ctx = ctx_heads[0] if G == 1 else jnp.concatenate(ctx_heads, axis=-1)    # (N, GD)

    # --- fused output projection for the whole group (contraction width = G*D) ---
    contrib = jnp.dot(ctx.astype(jnp.bfloat16), wproj_ref[hg],
                      preferred_element_type=jnp.float32)         # (N, E) f32

    @pl.when(hg == 0)
    def _():
        acc_ref[...] = contrib            # first group writes directly (no zero + add)

    @pl.when(hg > 0)
    def _():
        acc_ref[...] += contrib

    @pl.when(hg == num_groups - 1)
    def _():
        o_ref[0] = (acc_ref[...] + bproj_ref[...]).astype(o_ref.dtype)


def _pick_group(num_heads, head_dim, target_lanes=128):
    """Largest divisor of num_heads with group*head_dim <= target_lanes (>=1)."""
    g = max(1, min(num_heads, target_lanes // max(1, head_dim)))
    while num_heads % g:
        g -= 1
    return g


def prepare_params(wqkv, bqkv, wproj, num_heads, group):
    """One-time (init-time) repack of nn.Linear params to a grouped per-head layout.

    Returns bf16 (H/G, E, 3*G*D) qkv weight, f32 (H/G, 1, 3*G*D) qkv bias and
    bf16 (H/G, G*D, E) projection weight, with 1/sqrt(D) folded into q columns.
    """
    E = wqkv.shape[0]
    H, G = num_heads, group
    HG = H // G
    D = E // H
    GD = G * D
    scale = D ** -0.5

    # Columns of wqkv are ordered [s, h, d] (s in {q,k,v}); regroup per head-group
    # to [hg][e][s, g, d] so q/k/v of a group are contiguous GD-wide lane slices.
    wqkv_p = wqkv.reshape(E, 3, HG, G, D).transpose(2, 0, 1, 3, 4).reshape(HG, E, 3 * GD)
    bqkv_p = bqkv.reshape(3, HG, G, D).transpose(1, 0, 2, 3).reshape(HG, 1, 3 * GD)
    # Fold the attention scale into the q columns (weight + bias).
    wqkv_p = wqkv_p.at[:, :, :GD].multiply(scale)
    bqkv_p = bqkv_p.at[:, :, :GD].multiply(scale)

    # Rows of wproj are ordered h*D + d -> (HG, G*D, E), matching the in-kernel
    # concatenation order of per-head contexts within a group.
    wproj_p = wproj.reshape(HG, GD, E)

    return (wqkv_p.astype(jnp.bfloat16),
            bqkv_p.astype(jnp.float32),
            wproj_p.astype(jnp.bfloat16))


def multi_head_attention(x, wqkv, bqkv, wproj, bproj, *, num_heads, group=None):
    B, N, E = x.shape
    H = num_heads
    D = E // H
    G = group if group is not None else _pick_group(H, D)
    HG = H // G
    GD = G * D

    # NOTE: in a real model this repack happens once at init, not per forward call.
    wqkv_p, bqkv_p, wproj_p = prepare_params(wqkv, bqkv, wproj, H, G)
    bproj_f32 = bproj.astype(jnp.float32)
    x_bf = x.astype(jnp.bfloat16)          # halves x HBM->VMEM traffic; MXU eats bf16

    kernel = functools.partial(mha_kernel, head_dim=D, group=G)
    return pl.pallas_call(
        kernel,
        out_shape=jax.ShapeDtypeStruct((B, N, E), x.dtype),
        grid=(B, HG),                      # batch parallel (>=2 keeps both v7x TCs busy)
        in_specs=[
            pl.BlockSpec((1, N, E), lambda b, hg: (b, 0, 0)),          # x: one batch element
            pl.BlockSpec((HG, E, 3 * GD), lambda b, hg: (0, 0, 0)),    # Wqkv: VMEM-resident
            pl.BlockSpec((HG, 1, 3 * GD), lambda b, hg: (0, 0, 0)),    # bqkv: VMEM-resident
            pl.BlockSpec((HG, GD, E), lambda b, hg: (0, 0, 0)),        # Wproj: VMEM-resident
            pl.BlockSpec((1, E), lambda b, hg: (0, 0)),                # bproj (full)
        ],
        out_specs=pl.BlockSpec((1, N, E), lambda b, hg: (b, 0, 0)),
        scratch_shapes=[pltpu.VMEM((N, E), jnp.float32)],              # projection accumulator
        compiler_params=pltpu.CompilerParams(
            dimension_semantics=("parallel", "arbitrary"),
            # 48 MiB works on all gens and leaves ~16 MiB headroom on v7x (64 MiB VMEM).
            vmem_limit_bytes=48 * 1024 * 1024,
        ),
    )(x_bf, wqkv_p, bqkv_p, wproj_p, bproj_f32)


def mha_reference(x, wqkv, bqkv, wproj, bproj, *, num_heads):
    """Plain-JAX (f32) mirror of the PyTorch forward (eval mode) for verification."""
    B, N, E = x.shape
    D = E // num_heads
    qkv = x @ wqkv + bqkv                                            # (B, N, 3E)
    qkv = qkv.reshape(B, N, 3, num_heads, D).transpose(2, 0, 3, 1, 4)
    q, k, v = qkv[0], qkv[1], qkv[2]                                 # (B, H, N, D)
    att = jnp.einsum('bhnd,bhmd->bhnm', q, k) * (D ** -0.5)
    att = jax.nn.softmax(att, axis=-1)
    ctx = jnp.einsum('bhnm,bhmd->bhnd', att, v)
    ctx = ctx.transpose(0, 2, 1, 3).reshape(B, N, E)
    return ctx @ wproj + bproj


if __name__ == "__main__":
    # Small shapes consistent with the module's forward: (batch, num_patches, embed_dim)
    B, N, E, H = 2, 8, 32, 4

    key = jax.random.PRNGKey(0)
    kx, k1, k2, k3, k4 = jax.random.split(key, 5)

    x = jax.random.normal(kx, (B, N, E), dtype=jnp.float32)

    # Deterministic parameter init (shapes from nn.Linear(E, 3E) / nn.Linear(E, E)).
    bound = 1.0 / np.sqrt(E)
    wqkv = jax.random.uniform(k1, (E, 3 * E), jnp.float32, -bound, bound)
    bqkv = jax.random.uniform(k2, (1, 3 * E), jnp.float32, -bound, bound)
    wproj = jax.random.uniform(k3, (E, E), jnp.float32, -bound, bound)
    bproj = jax.random.uniform(k4, (1, E), jnp.float32, -bound, bound)

    out = multi_head_attention(x, wqkv, bqkv, wproj, bproj, num_heads=H)
    out = jax.block_until_ready(out)

    ref = mha_reference(x, wqkv, bqkv, wproj, bproj, num_heads=H)
    # Tolerance accounts for bf16 MXU feeds (accumulation stays f32) and the
    # EUP approximate reciprocal used for the softmax denominator.
    np.testing.assert_allclose(np.asarray(out), np.asarray(ref), rtol=2e-2, atol=2e-2)

    print("KERNEL_OK")
</pallas_src>

<mosaic_0001>
module attributes {stable_mosaic.version = 11 : i64} {
  func.func @mha_kernel(%arg0: i32, %arg1: i32, %arg2: memref<1x8x32xbf16, #tpu.memory_space<vmem>>, %arg3: memref<1x32x96xbf16, #tpu.memory_space<vmem>>, %arg4: memref<1x1x96xf32, #tpu.memory_space<vmem>>, %arg5: memref<1x32x32xbf16, #tpu.memory_space<vmem>>, %arg6: memref<1x32xf32, #tpu.memory_space<vmem>>, %arg7: memref<1x8x32xf32, #tpu.memory_space<vmem>>, %arg8: memref<8x32xf32, #tpu.memory_space<vmem>>) attributes {dimension_semantics = [#tpu.dimension_semantics<parallel>, #tpu.dimension_semantics<arbitrary>], iteration_bounds = array<i64: 2, 1>, scalar_prefetch = 0 : i64, scratch_operands = 1 : i64, tpu.core_type = #tpu.core_type<tc>, window_params = [{transform_indices = @transform_0, window_bounds = array<i64: 1, 8, 32>}, {pipeline_mode = #tpu.pipeline_mode<synchronous>, transform_indices = @transform_1, window_bounds = array<i64: 1, 32, 96>}, {pipeline_mode = #tpu.pipeline_mode<synchronous>, transform_indices = @transform_2, window_bounds = array<i64: 1, 1, 96>}, {pipeline_mode = #tpu.pipeline_mode<synchronous>, transform_indices = @transform_3, window_bounds = array<i64: 1, 32, 32>}, {pipeline_mode = #tpu.pipeline_mode<synchronous>, transform_indices = @transform_4, window_bounds = array<i64: 1, 32>}, {transform_indices = @transform_5, window_bounds = array<i64: 1, 8, 32>}]} {
    %c0 = arith.constant 0 : index
    %c0_0 = arith.constant 0 : index
    %c0_1 = arith.constant 0 : index
    %0 = vector.load %arg2[%c0, %c0_0, %c0_1] : memref<1x8x32xbf16, #tpu.memory_space<vmem>>, vector<1x8x32xbf16>
    %1 = vector.shape_cast %0 : vector<1x8x32xbf16> to vector<8x32xbf16>
    %2 = arith.index_cast %arg1 : i32 to index
    %c0_2 = arith.constant 0 : index
    %c0_3 = arith.constant 0 : index
    %3 = vector.load %arg3[%2, %c0_2, %c0_3] : memref<1x32x96xbf16, #tpu.memory_space<vmem>>, vector<1x32x96xbf16>
    %4 = vector.shape_cast %3 : vector<1x32x96xbf16> to vector<32x96xbf16>
    %cst = arith.constant dense<0.000000e+00> : vector<8x96xf32>
    %5 = tpu.matmul %1, %4, %cst {dimension_numbers = #tpu.dot_dimension_numbers<[1], [0], [0], [1], [0, 0, 1, 1], [], []>} : vector<8x32xbf16>, vector<32x96xbf16>, vector<8x96xf32> -> vector<8x96xf32>
    %6 = arith.index_cast %arg1 : i32 to index
    %c0_4 = arith.constant 0 : index
    %c0_5 = arith.constant 0 : index
    %7 = vector.load %arg4[%6, %c0_4, %c0_5] : memref<1x1x96xf32, #tpu.memory_space<vmem>>, vector<1x1x96xf32>
    %8 = vector.shape_cast %7 : vector<1x1x96xf32> to vector<1x96xf32>
    %9 = vector.broadcast %8 : vector<1x96xf32> to vector<8x96xf32>
    %10 = arith.addf %5, %9 : vector<8x96xf32>
    %11 = vector.extract_strided_slice %10 {offsets = [0, 0], sizes = [8, 8], strides = [1, 1]} : vector<8x96xf32> to vector<8x8xf32>
    %12 = vector.extract_strided_slice %10 {offsets = [0, 32], sizes = [8, 8], strides = [1, 1]} : vector<8x96xf32> to vector<8x8xf32>
    %13 = vector.extract_strided_slice %10 {offsets = [0, 64], sizes = [8, 8], strides = [1, 1]} : vector<8x96xf32> to vector<8x8xf32>
    %14 = arith.truncf %11 : vector<8x8xf32> to vector<8x8xbf16>
    %15 = arith.truncf %12 : vector<8x8xf32> to vector<8x8xbf16>
    "tpu.trace_start"() <{level = 10 : i32, message = "nd,md->nm"}> : () -> ()
    %cst_6 = arith.constant dense<0.000000e+00> : vector<8x8xf32>
    %16 = tpu.matmul %14, %15, %cst_6 {dimension_numbers = #tpu.dot_dimension_numbers<[1], [1], [0], [0], [0, 0, 1, 0], [], []>} : vector<8x8xbf16>, vector<8x8xbf16>, vector<8x8xf32> -> vector<8x8xf32>
    "tpu.trace_stop"() : () -> ()
    %cst_7 = arith.constant dense<0xFF800000> : vector<8xf32>
    %17 = vector.multi_reduction <maximumf>, %16, %cst_7 [1] : vector<8x8xf32> to vector<8xf32>
    %18 = vector.shape_cast %17 : vector<8xf32> to vector<8x1xf32>
    %19 = vector.broadcast %18 : vector<8x1xf32> to vector<8x8xf32>
    %20 = arith.subf %16, %19 : vector<8x8xf32>
    %21 = math.exp %20 : vector<8x8xf32>
    %cst_8 = arith.constant dense<0.000000e+00> : vector<8xf32>
    %22 = vector.multi_reduction <add>, %21, %cst_8 [1] : vector<8x8xf32> to vector<8xf32>
    %23 = vector.shape_cast %22 : vector<8xf32> to vector<8x1xf32>
    %24 = arith.truncf %21 : vector<8x8xf32> to vector<8x8xbf16>
    %25 = arith.truncf %13 : vector<8x8xf32> to vector<8x8xbf16>
    %cst_9 = arith.constant dense<0.000000e+00> : vector<8x8xf32>
    %26 = tpu.matmul %24, %25, %cst_9 {dimension_numbers = #tpu.dot_dimension_numbers<[1], [0], [0], [1], [0, 0, 1, 1], [], []>} : vector<8x8xbf16>, vector<8x8xbf16>, vector<8x8xf32> -> vector<8x8xf32>
    %27 = tpu.reciprocal %23 {approx = true} : vector<8x1xf32> -> vector<8x1xf32>
    %28 = vector.broadcast %27 : vector<8x1xf32> to vector<8x8xf32>
    %29 = arith.mulf %26, %28 : vector<8x8xf32>
    %30 = vector.extract_strided_slice %10 {offsets = [0, 8], sizes = [8, 8], strides = [1, 1]} : vector<8x96xf32> to vector<8x8xf32>
    %31 = vector.extract_strided_slice %10 {offsets = [0, 40], sizes = [8, 8], strides = [1, 1]} : vector<8x96xf32> to vector<8x8xf32>
    %32 = vector.extract_strided_slice %10 {offsets = [0, 72], sizes = [8, 8], strides = [1, 1]} : vector<8x96xf32> to vector<8x8xf32>
    %33 = arith.truncf %30 : vector<8x8xf32> to vector<8x8xbf16>
    %34 = arith.truncf %31 : vector<8x8xf32> to vector<8x8xbf16>
    "tpu.trace_start"() <{level = 10 : i32, message = "nd,md->nm"}> : () -> ()
    %cst_10 = arith.constant dense<0.000000e+00> : vector<8x8xf32>
    %35 = tpu.matmul %33, %34, %cst_10 {dimension_numbers = #tpu.dot_dimension_numbers<[1], [1], [0], [0], [0, 0, 1, 0], [], []>} : vector<8x8xbf16>, vector<8x8xbf16>, vector<8x8xf32> -> vector<8x8xf32>
    "tpu.trace_stop"() : () -> ()
    %cst_11 = arith.constant dense<0xFF800000> : vector<8xf32>
    %36 = vector.multi_reduction <maximumf>, %35, %cst_11 [1] : vector<8x8xf32> to vector<8xf32>
    %37 = vector.shape_cast %36 : vector<8xf32> to vector<8x1xf32>
    %38 = vector.broadcast %37 : vector<8x1xf32> to vector<8x8xf32>
    %39 = arith.subf %35, %38 : vector<8x8xf32>
    %40 = math.exp %39 : vector<8x8xf32>
    %cst_12 = arith.constant dense<0.000000e+00> : vector<8xf32>
    %41 = vector.multi_reduction <add>, %40, %cst_12 [1] : vector<8x8xf32> to vector<8xf32>
    %42 = vector.shape_cast %41 : vector<8xf32> to vector<8x1xf32>
    %43 = arith.truncf %40 : vector<8x8xf32> to vector<8x8xbf16>
    %44 = arith.truncf %32 : vector<8x8xf32> to vector<8x8xbf16>
    %cst_13 = arith.constant dense<0.000000e+00> : vector<8x8xf32>
    %45 = tpu.matmul %43, %44, %cst_13 {dimension_numbers = #tpu.dot_dimension_numbers<[1], [0], [0], [1], [0, 0, 1, 1], [], []>} : vector<8x8xbf16>, vector<8x8xbf16>, vector<8x8xf32> -> vector<8x8xf32>
    %46 = tpu.reciprocal %42 {approx = true} : vector<8x1xf32> -> vector<8x1xf32>
    %47 = vector.broadcast %46 : vector<8x1xf32> to vector<8x8xf32>
    %48 = arith.mulf %45, %47 : vector<8x8xf32>
    %49 = vector.extract_strided_slice %10 {offsets = [0, 16], sizes = [8, 8], strides = [1, 1]} : vector<8x96xf32> to vector<8x8xf32>
    %50 = vector.extract_strided_slice %10 {offsets = [0, 48], sizes = [8, 8], strides = [1, 1]} : vector<8x96xf32> to vector<8x8xf32>
    %51 = vector.extract_strided_slice %10 {offsets = [0, 80], sizes = [8, 8], strides = [1, 1]} : vector<8x96xf32> to vector<8x8xf32>
    %52 = arith.truncf %49 : vector<8x8xf32> to vector<8x8xbf16>
    %53 = arith.truncf %50 : vector<8x8xf32> to vector<8x8xbf16>
    "tpu.trace_start"() <{level = 10 : i32, message = "nd,md->nm"}> : () -> ()
    %cst_14 = arith.constant dense<0.000000e+00> : vector<8x8xf32>
    %54 = tpu.matmul %52, %53, %cst_14 {dimension_numbers = #tpu.dot_dimension_numbers<[1], [1], [0], [0], [0, 0, 1, 0], [], []>} : vector<8x8xbf16>, vector<8x8xbf16>, vector<8x8xf32> -> vector<8x8xf32>
    "tpu.trace_stop"() : () -> ()
    %cst_15 = arith.constant dense<0xFF800000> : vector<8xf32>
    %55 = vector.multi_reduction <maximumf>, %54, %cst_15 [1] : vector<8x8xf32> to vector<8xf32>
    %56 = vector.shape_cast %55 : vector<8xf32> to vector<8x1xf32>
    %57 = vector.broadcast %56 : vector<8x1xf32> to vector<8x8xf32>
    %58 = arith.subf %54, %57 : vector<8x8xf32>
    %59 = math.exp %58 : vector<8x8xf32>
    %cst_16 = arith.constant dense<0.000000e+00> : vector<8xf32>
    %60 = vector.multi_reduction <add>, %59, %cst_16 [1] : vector<8x8xf32> to vector<8xf32>
    %61 = vector.shape_cast %60 : vector<8xf32> to vector<8x1xf32>
    %62 = arith.truncf %59 : vector<8x8xf32> to vector<8x8xbf16>
    %63 = arith.truncf %51 : vector<8x8xf32> to vector<8x8xbf16>
    %cst_17 = arith.constant dense<0.000000e+00> : vector<8x8xf32>
    %64 = tpu.matmul %62, %63, %cst_17 {dimension_numbers = #tpu.dot_dimension_numbers<[1], [0], [0], [1], [0, 0, 1, 1], [], []>} : vector<8x8xbf16>, vector<8x8xbf16>, vector<8x8xf32> -> vector<8x8xf32>
    %65 = tpu.reciprocal %61 {approx = true} : vector<8x1xf32> -> vector<8x1xf32>
    %66 = vector.broadcast %65 : vector<8x1xf32> to vector<8x8xf32>
    %67 = arith.mulf %64, %66 : vector<8x8xf32>
    %68 = vector.extract_strided_slice %10 {offsets = [0, 24], sizes = [8, 8], strides = [1, 1]} : vector<8x96xf32> to vector<8x8xf32>
    %69 = vector.extract_strided_slice %10 {offsets = [0, 56], sizes = [8, 8], strides = [1, 1]} : vector<8x96xf32> to vector<8x8xf32>
    %70 = vector.extract_strided_slice %10 {offsets = [0, 88], sizes = [8, 8], strides = [1, 1]} : vector<8x96xf32> to vector<8x8xf32>
    %71 = arith.truncf %68 : vector<8x8xf32> to vector<8x8xbf16>
    %72 = arith.truncf %69 : vector<8x8xf32> to vector<8x8xbf16>
    "tpu.trace_start"() <{level = 10 : i32, message = "nd,md->nm"}> : () -> ()
    %cst_18 = arith.constant dense<0.000000e+00> : vector<8x8xf32>
    %73 = tpu.matmul %71, %72, %cst_18 {dimension_numbers = #tpu.dot_dimension_numbers<[1], [1], [0], [0], [0, 0, 1, 0], [], []>} : vector<8x8xbf16>, vector<8x8xbf16>, vector<8x8xf32> -> vector<8x8xf32>
    "tpu.trace_stop"() : () -> ()
    %cst_19 = arith.constant dense<0xFF800000> : vector<8xf32>
    %74 = vector.multi_reduction <maximumf>, %73, %cst_19 [1] : vector<8x8xf32> to vector<8xf32>
    %75 = vector.shape_cast %74 : vector<8xf32> to vector<8x1xf32>
    %76 = vector.broadcast %75 : vector<8x1xf32> to vector<8x8xf32>
    %77 = arith.subf %73, %76 : vector<8x8xf32>
    %78 = math.exp %77 : vector<8x8xf32>
    %cst_20 = arith.constant dense<0.000000e+00> : vector<8xf32>
    %79 = vector.multi_reduction <add>, %78, %cst_20 [1] : vector<8x8xf32> to vector<8xf32>
    %80 = vector.shape_cast %79 : vector<8xf32> to vector<8x1xf32>
    %81 = arith.truncf %78 : vector<8x8xf32> to vector<8x8xbf16>
    %82 = arith.truncf %70 : vector<8x8xf32> to vector<8x8xbf16>
    %cst_21 = arith.constant dense<0.000000e+00> : vector<8x8xf32>
    %83 = tpu.matmul %81, %82, %cst_21 {dimension_numbers = #tpu.dot_dimension_numbers<[1], [0], [0], [1], [0, 0, 1, 1], [], []>} : vector<8x8xbf16>, vector<8x8xbf16>, vector<8x8xf32> -> vector<8x8xf32>
    %84 = tpu.reciprocal %80 {approx = true} : vector<8x1xf32> -> vector<8x1xf32>
    %85 = vector.broadcast %84 : vector<8x1xf32> to vector<8x8xf32>
    %86 = arith.mulf %83, %85 : vector<8x8xf32>
    %87 = tpu.concatenate %29, %48, %67, %86 in 1 : vector<8x8xf32>, vector<8x8xf32>, vector<8x8xf32>, vector<8x8xf32> -> vector<8x32xf32>
    %88 = arith.truncf %87 : vector<8x32xf32> to vector<8x32xbf16>
    %89 = arith.index_cast %arg1 : i32 to index
    %c0_22 = arith.constant 0 : index
    %c0_23 = arith.constant 0 : index
    %90 = vector.load %arg5[%89, %c0_22, %c0_23] : memref<1x32x32xbf16, #tpu.memory_space<vmem>>, vector<1x32x32xbf16>
    %91 = vector.shape_cast %90 : vector<1x32x32xbf16> to vector<32x32xbf16>
    %cst_24 = arith.constant dense<0.000000e+00> : vector<8x32xf32>
    %92 = tpu.matmul %88, %91, %cst_24 {dimension_numbers = #tpu.dot_dimension_numbers<[1], [0], [0], [1], [0, 0, 1, 1], [], []>} : vector<8x32xbf16>, vector<32x32xbf16>, vector<8x32xf32> -> vector<8x32xf32>
    %c0_i32 = arith.constant 0 : i32
    %93 = arith.cmpi eq, %arg1, %c0_i32 : i32
    %94 = arith.extui %93 : i1 to i32
    %c0_i32_25 = arith.constant 0 : i32
    %95 = arith.cmpi ne, %94, %c0_i32_25 : i32
    scf.if %95 {
      %c0_30 = arith.constant 0 : index
      %c0_31 = arith.constant 0 : index
      %102 = vector.load %arg8[%c0_30, %c0_31] : memref<8x32xf32, #tpu.memory_space<vmem>>, vector<8x32xf32>
      tpu.vector_store %arg8[%c0_30, %c0_31], %92 {strides = array<i32>} : memref<8x32xf32, #tpu.memory_space<vmem>>, vector<8x32xf32>,
    } else {
    }
    %c0_i32_26 = arith.constant 0 : i32
    %96 = arith.cmpi sgt, %arg1, %c0_i32_26 : i32
    %97 = arith.extui %96 : i1 to i32
    %c0_i32_27 = arith.constant 0 : i32
    %98 = arith.cmpi ne, %97, %c0_i32_27 : i32
    scf.if %98 {
      %c0_30 = arith.constant 0 : index
      %c0_31 = arith.constant 0 : index
      %102 = vector.load %arg8[%c0_30, %c0_31] : memref<8x32xf32, #tpu.memory_space<vmem>>, vector<8x32xf32>
      %103 = arith.addf %102, %92 : vector<8x32xf32>
      %c0_32 = arith.constant 0 : index
      %c0_33 = arith.constant 0 : index
      %104 = vector.load %arg8[%c0_32, %c0_33] : memref<8x32xf32, #tpu.memory_space<vmem>>, vector<8x32xf32>
      tpu.vector_store %arg8[%c0_32, %c0_33], %103 {strides = array<i32>} : memref<8x32xf32, #tpu.memory_space<vmem>>, vector<8x32xf32>,
    } else {
    }
    %c0_i32_28 = arith.constant 0 : i32
    %99 = arith.cmpi eq, %arg1, %c0_i32_28 : i32
    %100 = arith.extui %99 : i1 to i32
    %c0_i32_29 = arith.constant 0 : i32
    %101 = arith.cmpi ne, %100, %c0_i32_29 : i32
    scf.if %101 {
      %c0_30 = arith.constant 0 : index
      %c0_31 = arith.constant 0 : index
      %102 = vector.load %arg8[%c0_30, %c0_31] : memref<8x32xf32, #tpu.memory_space<vmem>>, vector<8x32xf32>
      %c0_32 = arith.constant 0 : index
      %c0_33 = arith.constant 0 : index
      %103 = vector.load %arg6[%c0_32, %c0_33] : memref<1x32xf32, #tpu.memory_space<vmem>>, vector<1x32xf32>
      %104 = vector.broadcast %103 : vector<1x32xf32> to vector<8x32xf32>
      %105 = arith.addf %102, %104 : vector<8x32xf32>
      %c0_34 = arith.constant 0 : index
      %c0_35 = arith.constant 0 : index
      %c0_36 = arith.constant 0 : index
      %106 = vector.load %arg7[%c0_34, %c0_35, %c0_36] : memref<1x8x32xf32, #tpu.memory_space<vmem>>, vector<1x8x32xf32>
      %107 = vector.shape_cast %106 : vector<1x8x32xf32> to vector<8x32xf32>
      %108 = vector.shape_cast %105 : vector<8x32xf32> to vector<1x8x32xf32>
      tpu.vector_store %arg7[%c0_34, %c0_35, %c0_36], %108 {strides = array<i32>} : memref<1x8x32xf32, #tpu.memory_space<vmem>>, vector<1x8x32xf32>,
    } else {
    }
    return
  }
  func.func @transform_0(%arg0: i32, %arg1: i32) -> (i32, i32, i32) {
    %c0_i32 = arith.constant 0 : i32
    %c0_i32_0 = arith.constant 0 : i32
    %c0_i32_1 = arith.constant 0 : i32
    return %arg0, %c0_i32, %c0_i32_0 : i32, i32, i32
  }
  func.func @transform_1(%arg0: i32, %arg1: i32) -> (i32, i32, i32) {
    %c0_i32 = arith.constant 0 : i32
    %c0_i32_0 = arith.constant 0 : i32
    %c0_i32_1 = arith.constant 0 : i32
    %c0_i32_2 = arith.constant 0 : i32
    return %c0_i32, %c0_i32_0, %c0_i32_1 : i32, i32, i32
  }
  func.func @transform_2(%arg0: i32, %arg1: i32) -> (i32, i32, i32) {
    %c0_i32 = arith.constant 0 : i32
    %c0_i32_0 = arith.constant 0 : i32
    %c0_i32_1 = arith.constant 0 : i32
    %c0_i32_2 = arith.constant 0 : i32
    return %c0_i32, %c0_i32_0, %c0_i32_1 : i32, i32, i32
  }
  func.func @transform_3(%arg0: i32, %arg1: i32) -> (i32, i32, i32) {
    %c0_i32 = arith.constant 0 : i32
    %c0_i32_0 = arith.constant 0 : i32
    %c0_i32_1 = arith.constant 0 : i32
    %c0_i32_2 = arith.constant 0 : i32
    return %c0_i32, %c0_i32_0, %c0_i32_1 : i32, i32, i32
  }
  func.func @transform_4(%arg0: i32, %arg1: i32) -> (i32, i32) {
    %c0_i32 = arith.constant 0 : i32
    %c0_i32_0 = arith.constant 0 : i32
    %c0_i32_1 = arith.constant 0 : i32
    return %c0_i32, %c0_i32_0 : i32, i32
  }
  func.func @transform_5(%arg0: i32, %arg1: i32) -> (i32, i32, i32) {
    %c0_i32 = arith.constant 0 : i32
    %c0_i32_0 = arith.constant 0 : i32
    %c0_i32_1 = arith.constant 0 : i32
    return %arg0, %c0_i32, %c0_i32_0 : i32, i32, i32
  }
}

</mosaic_0001>

<llo_original>
// kernel: tpu_custom_call.1
$region0: #{tpu_custom_call.1}
  #allocation0 [shape = 'u32[]', space=smem, size = 0x4, offset = 0x4, fixed_abs, tag = 'smem constant byte address 0x4 - core index']
  #allocation1 [shape = 'u32[72,128]{1,0:T(1,128)}', space=vmem, size = 0x9000, scoped, tag = 'internal scratch']
  #allocation2 [shape = 'f32[8,32]{1,0:T(8,128)}', space=vmem, size = 0x1000, scoped, tag = 'scratch operand']
  %s0 = inlined_call_operand.hbm [shape: bf16[2,8,32], index: 0, kind: input, shape index: {}]
  %s1 = inlined_call_operand.hbm [shape: bf16[1,32,96], index: 1, kind: input, shape index: {}]
  %s2 = inlined_call_operand.vmem [shape: f32[1,1,96], index: 2, kind: input, shape index: {}]
  %s3 = inlined_call_operand.hbm [shape: bf16[1,32,32], index: 3, kind: input, shape index: {}]
  %s4 = inlined_call_operand.vmem [shape: f32[1,32], index: 4, kind: input, shape index: {}]
  %s5 = inlined_call_operand.hbm [shape: f32[2,8,32], index: 5, kind: output, shape index: {}]
  %s6 = sld [smem:[#allocation0]]
  $region77: #{tpu_custom_call.1} parent=0
    _
  %s8 = ssub.s32 1, %s6
  %s9 = scalar_select 0, %s8, %s6
  $region1: #{tpu_custom_call.1} parent=0
    #allocation3 [shape = 'u8[4096]{0}', space=vmem, size = 0x1000, scoped, tag = 'input window, operand 0']
    #allocation4 [shape = 's32[2]{0}', space=sflag, size = 0x8, scoped, tag = 'scoped memory for tpu_custom_call.1']
    #allocation5 [shape = 's32[2]{0}', space=sflag, size = 0x8, scoped, tag = 'scoped memory for tpu_custom_call.1']
    #allocation6 [shape = 'u8[8192]{0}', space=vmem, size = 0x2000, scoped, tag = 'input window, operand 1, single buffered']
    #allocation7 [shape = 's32[1]{0}', space=sflag, size = 0x4, scoped, tag = 'scoped memory for tpu_custom_call.1']
    #allocation8 [shape = 'u8[8192]{0}', space=vmem, size = 0x2000, scoped, tag = 'input window, operand 3, single buffered']
    #allocation9 [shape = 'u8[8192]{0}', space=vmem, size = 0x2000, scoped, tag = 'output window, operand 0']
    %10 = vsyncpa [#allocation4], 0
    %s11 = scalar_lea.sflag [#allocation4], 1
    %12 = vsyncpa %s11, 0
    %13 = vsyncpa [#allocation7], 0
    %14 = vsyncpa [#allocation5], 0
    %s15 = scalar_lea.sflag [#allocation5], 1
    %16 = vsyncpa %s15, 0
    loop: start=0, step=1, limit=4
    $region2: #{tpu_custom_call.1} parent=1 // loop_pre_header
      _
    $region3: #{tpu_custom_call.1} parent=1 // loop_header
      %s18 = sphi 0, %s22
      %p19 = scmp.ge.s32.totalorder %s18, 4
      %s25 = sphi 0, %s37
      %s26 = sphi 0, %s33
      %s27 = sphi 0, %s25
      %s28 = sphi 0, %s26
      %s29 = sphi 0, %s27
      %s30 = sphi 0, %s28
      %s40 = sphi 0, %s42
      %s43 = sphi 0, %s40
      %s44 = sphi 0, %s43
      %s60 = sphi 0, %s44
      %s64 = sphi 0, %s64
      %s66 = sphi 0, %s64
      %s67 = sphi 0, %s66
      %s81 = sphi 0, %s67
      %s85 = sphi 0, %s85
      %s87 = sphi 0, %s85
      %s88 = sphi 0, %s87
      %s102 = sphi 0, %s88
      %s106 = sphi 0, %s106
      %s108 = sphi 0, %s106
      %s109 = sphi 0, %s108
      %s123 = sphi 0, %s109
      %s127 = sphi 0, %s127
      %s129 = sphi 0, %s127
      %s130 = sphi 0, %s129
      %s144 = sphi 0, %s130
      %s150 = sphi 0, %s152
      %s153 = sphi 0, %s150
      %s154 = sphi 0, %s153
      %s170 = sphi 0, %s154
    $region4: #{tpu_custom_call.1} parent=1 // loop_header_branch
      %21 = sbr.rel (%p19) target = $region8
    $region5: #{tpu_custom_call.1} parent=1 // loop_body
      %s23 = ssub.s32 %s18, 1
      %s24 = ssub.s32 %s18, 2
      %s31 = sadd.s32 1, %s26
      %p32 = scmp.ge.s32.totalorder %s31, 1
      %s33 = scalar_select %p32, 0, %s31
      %s34 = sadd.s32 1, %s25
      %s35 = scalar_select %p32, %s34, %s25
      %p36 = scmp.ge.s32.totalorder %s35, 2
      %s37 = scalar_select %p36, 0, %s35
      %s38 = ssub.s32 %s25, %s37
      %p39 = scmp.eq.s32.totalorder %s38, 0
      %s41 = sadd.s32 %s40, 1
      %s42 = scalar_select %p39, %s40, %s41
      %p45 = pneg %p39
      %p46 = scmp.eq.s32.totalorder %s18, 1
      %p47 = por %p45, %p46
      %p48 = scmp.ne.s32.totalorder %s40, %s43
      %p49 = scmp.eq.s32.totalorder %s18, 0
      %p50 = por %p48, %p49
      %p51 = scmp.ne.s32.totalorder %s40, %s43
      %p52 = scmp.eq.s32.totalorder %s23, 1
      %p53 = por %p51, %p52
      %p54 = scmp.ne.s32.totalorder %s43, %s44
      %p55 = scmp.eq.s32.totalorder %s23, 0
      %p56 = por %p54, %p55
      %p57 = scmp.ne.s32.totalorder %s43, %s44
      %p58 = scmp.eq.s32.totalorder %s24, 1
      %p59 = por %p57, %p58
      %p61 = scmp.ne.s32.totalorder %s44, %s60
      %p62 = scmp.eq.s32.totalorder %s24, 0
      %p63 = por %p61, %p62
      %s65 = sadd.s32 %s64, 1
      %p68 = scmp.eq.s32.totalorder %s18, 1
      %p69 = scmp.ne.s32.totalorder %s64, %s66
      %p70 = scmp.eq.s32.totalorder %s18, 0
      %p71 = por %p69, %p70
      %p72 = scmp.ne.s32.totalorder %s64, %s66
      %p73 = scmp.eq.s32.totalorder %s23, 1
      %p74 = por %p72, %p73
      %p75 = scmp.ne.s32.totalorder %s66, %s67
      %p76 = scmp.eq.s32.totalorder %s23, 0
      %p77 = por %p75, %p76
      %p78 = scmp.ne.s32.totalorder %s66, %s67
      %p79 = scmp.eq.s32.totalorder %s24, 1
      %p80 = por %p78, %p79
      %p82 = scmp.ne.s32.totalorder %s67, %s81
      %p83 = scmp.eq.s32.totalorder %s24, 0
      %p84 = por %p82, %p83
      %s86 = sadd.s32 %s85, 1
      %p89 = scmp.eq.s32.totalorder %s18, 1
      %p90 = scmp.ne.s32.totalorder %s85, %s87
      %p91 = scmp.eq.s32.totalorder %s18, 0
      %p92 = por %p90, %p91
      %p93 = scmp.ne.s32.totalorder %s85, %s87
      %p94 = scmp.eq.s32.totalorder %s23, 1
      %p95 = por %p93, %p94
      %p96 = scmp.ne.s32.totalorder %s87, %s88
      %p97 = scmp.eq.s32.totalorder %s23, 0
      %p98 = por %p96, %p97
      %p99 = scmp.ne.s32.totalorder %s87, %s88
      %p100 = scmp.eq.s32.totalorder %s24, 1
      %p101 = por %p99, %p100
      %p103 = scmp.ne.s32.totalorder %s88, %s102
      %p104 = scmp.eq.s32.totalorder %s24, 0
      %p105 = por %p103, %p104
      %s107 = sadd.s32 %s106, 1
      %p110 = scmp.eq.s32.totalorder %s18, 1
      %p111 = scmp.ne.s32.totalorder %s106, %s108
      %p112 = scmp.eq.s32.totalorder %s18, 0
      %p113 = por %p111, %p112
      %p114 = scmp.ne.s32.totalorder %s106, %s108
      %p115 = scmp.eq.s32.totalorder %s23, 1
      %p116 = por %p114, %p115
      %p117 = scmp.ne.s32.totalorder %s108, %s109
      %p118 = scmp.eq.s32.totalorder %s23, 0
      %p119 = por %p117, %p118
      %p120 = scmp.ne.s32.totalorder %s108, %s109
      %p121 = scmp.eq.s32.totalorder %s24, 1
      %p122 = por %p120, %p121
      %p124 = scmp.ne.s32.totalorder %s109, %s123
      %p125 = scmp.eq.s32.totalorder %s24, 0
      %p126 = por %p124, %p125
      %s128 = sadd.s32 %s127, 1
      %p131 = scmp.eq.s32.totalorder %s18, 1
      %p132 = scmp.ne.s32.totalorder %s127, %s129
      %p133 = scmp.eq.s32.totalorder %s18, 0
      %p134 = por %p132, %p133
      %p135 = scmp.ne.s32.totalorder %s127, %s129
      %p136 = scmp.eq.s32.totalorder %s23, 1
      %p137 = por %p135, %p136
      %p138 = scmp.ne.s32.totalorder %s129, %s130
      %p139 = scmp.eq.s32.totalorder %s23, 0
      %p140 = por %p138, %p139
      %p141 = scmp.ne.s32.totalorder %s129, %s130
      %p142 = scmp.eq.s32.totalorder %s24, 1
      %p143 = por %p141, %p142
      %p145 = scmp.ne.s32.totalorder %s130, %s144
      %p146 = scmp.eq.s32.totalorder %s24, 0
      %p147 = por %p145, %p146
      %s148 = ssub.s32 %s25, %s37
      %p149 = scmp.eq.s32.totalorder %s148, 0
      %s151 = sadd.s32 %s150, 1
      %s152 = scalar_select %p149, %s150, %s151
      %p155 = pneg %p149
      %p156 = scmp.eq.s32.totalorder %s18, 1
      %p157 = por %p155, %p156
      %p158 = scmp.ne.s32.totalorder %s150, %s153
      %p159 = scmp.eq.s32.totalorder %s18, 0
      %p160 = por %p158, %p159
      %p161 = scmp.ne.s32.totalorder %s150, %s153
      %p162 = scmp.eq.s32.totalorder %s23, 1
      %p163 = por %p161, %p162
      %p164 = scmp.ne.s32.totalorder %s153, %s154
      %p165 = scmp.eq.s32.totalorder %s23, 0
      %p166 = por %p164, %p165
      %p167 = scmp.ne.s32.totalorder %s153, %s154
      %p168 = scmp.eq.s32.totalorder %s24, 1
      %p169 = por %p167, %p168
      %p171 = scmp.ne.s32.totalorder %s154, %s170
      %p172 = scmp.eq.s32.totalorder %s24, 0
      %p173 = por %p171, %p172
      %p174 = scmp.le.s32.totalorder 1, %s18
      %p175 = scmp.lt.s32.totalorder %s18, 3
      %p176 = pnand %p174, %p175
      %p177 = pneg %p176
      // Predicated region
      $region9: #{tpu_custom_call.1} parent=5 // pred_check
        _
      $region10: #{tpu_custom_call.1} parent=5 // pred_check_branch
        %179 = sbr.rel (%p176) target = $region12
      $region11: #{tpu_custom_call.1} parent=5 // pred_region
        %s180 = ssub.s32 %s18, 1
        // Predicated region
        $region13: #{tpu_custom_call.1} parent=11 // pred_check
          %p181 = pneg %p77
        $region14: #{tpu_custom_call.1} parent=11 // pred_check_branch
          %183 = sbr.rel (%p181) target = $region16
        $region15: #{tpu_custom_call.1} parent=11 // pred_region
          %185 = vsyncadd [#allocation7], 0
          %s186 = sshll.u32 %s1, 4
          %s187 = int_to_ptr.hbm [resolvable:$true] %s186
          %s188 = sshll.u32 [#allocation6], 4
          %s189 = int_to_ptr.vmem [resolvable:$true] %s188
          %194 = dma.hbm_to_vmem [thread:$0]  %s187, 256, %s189, [#allocation7], 64, 64, 4
        $region16: #{tpu_custom_call.1} parent=11 // pred_fallthru
          _
        // Predicated region
        $region17: #{tpu_custom_call.1} parent=11 // pred_check
          %p195 = pneg %p98
        $region18: #{tpu_custom_call.1} parent=11 // pred_check_branch
          %197 = sbr.rel (%p195) target = $region20
        $region19: #{tpu_custom_call.1} parent=11 // pred_region
          _
        $region20: #{tpu_custom_call.1} parent=11 // pred_fallthru
          _
        // Predicated region
        $region21: #{tpu_custom_call.1} parent=11 // pred_check
          %p198 = pneg %p119
        $region22: #{tpu_custom_call.1} parent=11 // pred_check_branch
          %200 = sbr.rel (%p198) target = $region24
        $region23: #{tpu_custom_call.1} parent=11 // pred_region
          %202 = vsyncadd [#allocation7], 0
          %s203 = sshll.u32 %s3, 4
          %s204 = int_to_ptr.hbm [resolvable:$true] %s203
          %s205 = sshll.u32 [#allocation8], 4
          %s206 = int_to_ptr.vmem [resolvable:$true] %s205
          %211 = dma.hbm_to_vmem [thread:$0]  %s204, 256, %s206, [#allocation7], 64, 64, 4
        $region24: #{tpu_custom_call.1} parent=11 // pred_fallthru
          _
        // Predicated region
        $region25: #{tpu_custom_call.1} parent=11 // pred_check
          %p212 = pneg %p140
        $region26: #{tpu_custom_call.1} parent=11 // pred_check_branch
          %214 = sbr.rel (%p212) target = $region28
        $region27: #{tpu_custom_call.1} parent=11 // pred_region
          _
        $region28: #{tpu_custom_call.1} parent=11 // pred_fallthru
          _
      $region12: #{tpu_custom_call.1} parent=5 // pred_fallthru
        _
      %p215 = scmp.lt.s32.totalorder %s18, 2
      // Predicated region
      $region29: #{tpu_custom_call.1} parent=5 // pred_check
        %p216 = pneg %p215
      $region30: #{tpu_custom_call.1} parent=5 // pred_check_branch
        %218 = sbr.rel (%p216) target = $region32
      $region31: #{tpu_custom_call.1} parent=5 // pred_region
        // Predicated region
        $region33: #{tpu_custom_call.1} parent=31 // pred_check
          %p219 = pneg %p50
        $region34: #{tpu_custom_call.1} parent=31 // pred_check_branch
          %221 = sbr.rel (%p219) target = $region36
        $region35: #{tpu_custom_call.1} parent=31 // pred_region
          %s222 = sand.u32 %s40, 1
          %s223 = scalar_lea.sflag [#allocation4], %s222
          %s224 = sand.u32 %s40, 1
          %s225 = smul.addr %s224, 4
          %s226 = scalar_lea.vmem [#allocation3], %s225
          %228 = vsyncadd %s223, 0
          %s229 = smul.addr %s25, 4
          %s230 = scalar_lea.hbm %s0, %s229
          %s232 = sshll.u32 %s230, 4
          %s233 = int_to_ptr.hbm [resolvable:$true] %s232
          %s234 = sshll.u32 %s226, 4
          %s235 = int_to_ptr.vmem [resolvable:$true] %s234
          %237 = dma.hbm_to_vmem [thread:$0]  %s233, 64, %s235, %s223
        $region36: #{tpu_custom_call.1} parent=31 // pred_fallthru
          _
      $region32: #{tpu_custom_call.1} parent=5 // pred_fallthru
        _
      %p238 = scmp.le.s32.totalorder 1, %s18
      %p239 = scmp.lt.s32.totalorder %s18, 3
      %p240 = pnand %p238, %p239
      %p241 = pneg %p240
      // Predicated region
      $region37: #{tpu_custom_call.1} parent=5 // pred_check
        _
      $region38: #{tpu_custom_call.1} parent=5 // pred_check_branch
        %243 = sbr.rel (%p240) target = $region40
      $region39: #{tpu_custom_call.1} parent=5 // pred_region
        %s244 = ssub.s32 %s18, 1
        %s245 = sand.u32 %s43, 1
        %s246 = scalar_lea.sflag [#allocation4], %s245
        %s247 = sand.u32 %s43, 1
        %s248 = smul.addr %s247, 4
        %s249 = scalar_lea.vmem [#allocation3], %s248
        // Predicated region
        $region41: #{tpu_custom_call.1} parent=39 // pred_check
          %p250 = pneg %p56
        $region42: #{tpu_custom_call.1} parent=39 // pred_check_branch
          %252 = sbr.rel (%p250) target = $region44
        $region43: #{tpu_custom_call.1} parent=39 // pred_region
          %254 = dma.done %s246, 64
        $region44: #{tpu_custom_call.1} parent=39 // pred_fallthru
          _
        // Predicated region
        $region45: #{tpu_custom_call.1} parent=39 // pred_check
          %p255 = pneg %p77
        $region46: #{tpu_custom_call.1} parent=39 // pred_check_branch
          %257 = sbr.rel (%p255) target = $region48
        $region47: #{tpu_custom_call.1} parent=39 // pred_region
          %259 = dma.done [#allocation7], 256
        $region48: #{tpu_custom_call.1} parent=39 // pred_fallthru
          _
        // Predicated region
        $region49: #{tpu_custom_call.1} parent=39 // pred_check
          %p260 = pneg %p119
        $region50: #{tpu_custom_call.1} parent=39 // pred_check_branch
          %262 = sbr.rel (%p260) target = $region52
        $region51: #{tpu_custom_call.1} parent=39 // pred_region
          %264 = dma.done [#allocation7], 256
        $region52: #{tpu_custom_call.1} parent=39 // pred_fallthru
          _
        %s265 = sand.u32 %s43, 1
        %s266 = scalar_lea.sflag [#allocation4], %s265
        %s267 = sand.u32 %s43, 1
        %s268 = smul.addr %s267, 4
        %s269 = scalar_lea.vmem [#allocation3], %s268
        %p270 = pneg %p56
        %p271 = pneg %p53
        %p272 = pneg %p77
        %p273 = pneg %p74
        %p274 = pneg %p98
        %p275 = pneg %p95
        %p276 = pneg %p119
        %p277 = pneg %p116
        %p278 = pneg %p140
        %p279 = pneg %p137
        %p280 = pneg %p166
        %p281 = pneg %p163
        %s282 = sand.u32 %s153, 1
        %s283 = scalar_lea.sflag [#allocation5], %s282
        %s284 = sand.u32 %s153, 1
        %s285 = smul.addr %s284, 8
        %s286 = scalar_lea.vmem [#allocation9], %s285
        %v288 = vld [vmem:[%s249] sm:$0xf]
        %s289 = smul.u32 %s28, 4
        %s290 = smul.addr %s289, 4
        %s291 = scalar_lea.vmem [#allocation6], %s290
        %v292 = vld [vmem:[%s291] sm:$0xf]
        %v293 = vld [vmem:[%s291 + $0x4] sm:$0xf]
        %v294 = vld [vmem:[%s291 + $0x8] sm:$0xf]
        %v295 = vld [vmem:[%s291 + $0xc] sm:$0xf]
        %s296 = scalar_lea.vmem %s2, %s28
        %v297 = vld [vmem:[%s296] sm:$0x1]
        %v299 = vperm.slane %v297, 0
        %v305 = vunpack.c.l.b16 %v292
        %v306 = vunpack.c.l.b16 %v293
        %v307 = vunpack.c.l.b16 %v294
        %v308 = vunpack.c.l.b16 %v295
        %v309 = vpack.c.b16 %v306, %v305
        %v310 = vpack.c.b16 %v308, %v307
        %vm313 = vcmask 261120
        %v315 = vsel %vm313, %v288, 0
        %317 = vmatpush.bf16.msra.mxu0 0
        %318 = vmatpush.bf16.msra.mxu0 0
        %319 = vmatpush.bf16.msra.mxu0 0
        %320 = vmatpush.bf16.msra.mxu0 0
        %321 = vmatpush.bf16.msra.mxu0 0
        %322 = vmatpush.bf16.msra.mxu0 0
        %323 = vmatpush.bf16.msra.mxu0 %v310
        %324 = vmatpush.bf16.msra.mxu0 %v309
        %325 = vmatmul.bf16.gmra.mxu0 %v315
        %v326 = vpop.f32.mrf.mxu0
        %v327 = vadd.f32 %v299, %v326
        %v328 = vpop.f32.mrf.mxu0
        %329 = vdwg.mxu0
        %v330 = vpack.c.bf16 %v327, %v327
        %332 = vrot.lane.b32.xlu0 %v330, 96
        %v333 = vpop.permute.xlu0 %332
        %vm334 = vcmask 64512
        %v336 = vsel %vm334, %v330, 0
        %v339 = vsel %vm334, %v333, 0
        %341 = vmatpush.bf16.xpose.msra.mxu0 0
        %342 = vmatpush.bf16.xpose.msra.mxu0 0
        %343 = vmatpush.bf16.xpose.msra.mxu0 0
        %344 = vmatpush.bf16.xpose.msra.mxu0 0
        %345 = vmatpush.bf16.xpose.msra.mxu0 0
        %346 = vmatpush.bf16.xpose.msra.mxu0 0
        %347 = vmatpush.bf16.xpose.msra.mxu0 0
        %348 = vmatpush.bf16.xpose.msra.mxu0 %v339
        %349 = vmatmul.bf16.gmra.mxu0 %v336
        %v350 = vpop.f32.mrf.mxu0
        %v351 = vadd.f32 0.0, %v350
        %v352 = vpop.f32.mrf.mxu0
        %353 = vdwg.mxu0
        %v354 = vsel %vm334, %v351, -inf
        %355 = vmax.xlane.f32.xlu0 %v354
        %v356 = vpop.xlane.xlu0 %355
        %v357 = vsub.f32 %v351, %v356
        %v358 = vmul.f32 %v357, 1.442695
        %v359 = vpow.pop %v358
        %v360 = vsel %vm334, %v359, 0.0
        %361 = vadd.xlane.f32.xlu0 %v360
        %v362 = vpop.xlane.xlu0 %361
        %v363 = vpack.c.bf16 %v359, %v359
        %364 = vrot.lane.b32.xlu0 %v330, 64
        %v365 = vpop.permute.xlu0 %364
        %v367 = vsel %vm334, %v363, 0
        %vm369 = vcmask 1043456
        %v371 = vsel %vm369, %v365, 0
        %373 = vmatpush.bf16.msra.mxu0 0
        %374 = vmatpush.bf16.msra.mxu0 0
        %375 = vmatpush.bf16.msra.mxu0 0
        %376 = vmatpush.bf16.msra.mxu0 0
        %377 = vmatpush.bf16.msra.mxu0 0
        %378 = vmatpush.bf16.msra.mxu0 0
        %379 = vmatpush.bf16.msra.mxu0 0
        %380 = vmatpush.bf16.msra.mxu0 %v371
        %381 = vmatmul.bf16.gmra.mxu0 %v367
        %v382 = vpop.f32.mrf.mxu0
        %v383 = vadd.f32 0.0, %v382
        %v384 = vpop.f32.mrf.mxu0
        %385 = vdwg.mxu0
        %v386 = vrcp.pop %v362
        %v387 = vmul.f32 %v383, %v386
        %388 = vrot.lane.b32.xlu0 %v330, 120
        %v389 = vpop.permute.xlu0 %388
        %390 = vrot.lane.b32.xlu0 %v330, 88
        %v391 = vpop.permute.xlu0 %390
        %v393 = vsel %vm334, %v389, 0
        %v396 = vsel %vm334, %v391, 0
        %398 = vmatpush.bf16.xpose.msra.mxu0 0
        %399 = vmatpush.bf16.xpose.msra.mxu0 0
        %400 = vmatpush.bf16.xpose.msra.mxu0 0
        %401 = vmatpush.bf16.xpose.msra.mxu0 0
        %402 = vmatpush.bf16.xpose.msra.mxu0 0
        %403 = vmatpush.bf16.xpose.msra.mxu0 0
        %404 = vmatpush.bf16.xpose.msra.mxu0 0
        %405 = vmatpush.bf16.xpose.msra.mxu0 %v396
        %406 = vmatmul.bf16.gmra.mxu0 %v393
        %v407 = vpop.f32.mrf.mxu0
        %v408 = vadd.f32 0.0, %v407
        %v409 = vpop.f32.mrf.mxu0
        %410 = vdwg.mxu0
        %v411 = vsel %vm334, %v408, -inf
        %412 = vmax.xlane.f32.xlu0 %v411
        %v413 = vpop.xlane.xlu0 %412
        %v414 = vsub.f32 %v408, %v413
        %v415 = vmul.f32 %v414, 1.442695
        %v416 = vpow.pop %v415
        %v417 = vsel %vm334, %v416, 0.0
        %418 = vadd.xlane.f32.xlu0 %v417
        %v419 = vpop.xlane.xlu0 %418
        %v420 = vpack.c.bf16 %v416, %v416
        %421 = vrot.lane.b32.xlu0 %v330, 56
        %v422 = vpop.permute.xlu0 %421
        %v424 = vsel %vm334, %v420, 0
        %v427 = vsel %vm369, %v422, 0
        %429 = vmatpush.bf16.msra.mxu0 0
        %430 = vmatpush.bf16.msra.mxu0 0
        %431 = vmatpush.bf16.msra.mxu0 0
        %432 = vmatpush.bf16.msra.mxu0 0
        %433 = vmatpush.bf16.msra.mxu0 0
        %434 = vmatpush.bf16.msra.mxu0 0
        %435 = vmatpush.bf16.msra.mxu0 0
        %436 = vmatpush.bf16.msra.mxu0 %v427
        %437 = vmatmul.bf16.gmra.mxu0 %v424
        %v438 = vpop.f32.mrf.mxu0
        %v439 = vadd.f32 0.0, %v438
        %v440 = vpop.f32.mrf.mxu0
        %441 = vdwg.mxu0
        %v442 = vrcp.pop %v419
        %v443 = vmul.f32 %v439, %v442
        %444 = vrot.lane.b32.xlu0 %v330, 112
        %v445 = vpop.permute.xlu0 %444
        %446 = vrot.lane.b32.xlu0 %v330, 80
        %v447 = vpop.permute.xlu0 %446
        %v449 = vsel %vm334, %v445, 0
        %v452 = vsel %vm334, %v447, 0
        %454 = vmatpush.bf16.xpose.msra.mxu0 0
        %455 = vmatpush.bf16.xpose.msra.mxu0 0
        %456 = vmatpush.bf16.xpose.msra.mxu0 0
        %457 = vmatpush.bf16.xpose.msra.mxu0 0
        %458 = vmatpush.bf16.xpose.msra.mxu0 0
        %459 = vmatpush.bf16.xpose.msra.mxu0 0
        %460 = vmatpush.bf16.xpose.msra.mxu0 0
        %461 = vmatpush.bf16.xpose.msra.mxu0 %v452
        %462 = vmatmul.bf16.gmra.mxu0 %v449
        %v463 = vpop.f32.mrf.mxu0
        %v464 = vadd.f32 0.0, %v463
        %v465 = vpop.f32.mrf.mxu0
        %466 = vdwg.mxu0
        %v467 = vsel %vm334, %v464, -inf
        %468 = vmax.xlane.f32.xlu0 %v467
        %v469 = vpop.xlane.xlu0 %468
        %v470 = vsub.f32 %v464, %v469
        %v471 = vmul.f32 %v470, 1.442695
        %v472 = vpow.pop %v471
        %v473 = vsel %vm334, %v472, 0.0
        %474 = vadd.xlane.f32.xlu0 %v473
        %v475 = vpop.xlane.xlu0 %474
        %v476 = vpack.c.bf16 %v472, %v472
        %477 = vrot.lane.b32.xlu0 %v330, 48
        %v478 = vpop.permute.xlu0 %477
        %v480 = vsel %vm334, %v476, 0
        %v483 = vsel %vm369, %v478, 0
        %485 = vmatpush.bf16.msra.mxu0 0
        %486 = vmatpush.bf16.msra.mxu0 0
        %487 = vmatpush.bf16.msra.mxu0 0
        %488 = vmatpush.bf16.msra.mxu0 0
        %489 = vmatpush.bf16.msra.mxu0 0
        %490 = vmatpush.bf16.msra.mxu0 0
        %491 = vmatpush.bf16.msra.mxu0 0
        %492 = vmatpush.bf16.msra.mxu0 %v483
        %493 = vmatmul.bf16.gmra.mxu0 %v480
        %v494 = vpop.f32.mrf.mxu0
        %v495 = vadd.f32 0.0, %v494
        %v496 = vpop.f32.mrf.mxu0
        %497 = vdwg.mxu0
        %v498 = vrcp.pop %v475
        %v499 = vmul.f32 %v495, %v498
        %500 = vrot.lane.b32.xlu0 %v330, 104
        %v501 = vpop.permute.xlu0 %500
        %502 = vrot.lane.b32.xlu0 %v330, 72
        %v503 = vpop.permute.xlu0 %502
        %v505 = vsel %vm334, %v501, 0
        %v508 = vsel %vm334, %v503, 0
        %510 = vmatpush.bf16.xpose.msra.mxu0 0
        %511 = vmatpush.bf16.xpose.msra.mxu0 0
        %512 = vmatpush.bf16.xpose.msra.mxu0 0
        %513 = vmatpush.bf16.xpose.msra.mxu0 0
        %514 = vmatpush.bf16.xpose.msra.mxu0 0
        %515 = vmatpush.bf16.xpose.msra.mxu0 0
        %516 = vmatpush.bf16.xpose.msra.mxu0 0
        %517 = vmatpush.bf16.xpose.msra.mxu0 %v508
        %518 = vmatmul.bf16.gmra.mxu0 %v505
        %v519 = vpop.f32.mrf.mxu0
        %v520 = vadd.f32 0.0, %v519
        %v521 = vpop.f32.mrf.mxu0
        %522 = vdwg.mxu0
        %v523 = vsel %vm334, %v520, -inf
        %524 = vmax.xlane.f32.xlu0 %v523
        %v525 = vpop.xlane.xlu0 %524
        %v526 = vsub.f32 %v520, %v525
        %v527 = vmul.f32 %v526, 1.442695
        %v528 = vpow.pop %v527
        %v529 = vsel %vm334, %v528, 0.0
        %530 = vadd.xlane.f32.xlu0 %v529
        %v531 = vpop.xlane.xlu0 %530
        %v532 = vpack.c.bf16 %v528, %v528
        %533 = vrot.lane.b32.xlu0 %v330, 40
        %v534 = vpop.permute.xlu0 %533
        %v536 = vsel %vm334, %v532, 0
        %v539 = vsel %vm369, %v534, 0
        %541 = vmatpush.bf16.msra.mxu0 0
        %542 = vmatpush.bf16.msra.mxu0 0
        %543 = vmatpush.bf16.msra.mxu0 0
        %544 = vmatpush.bf16.msra.mxu0 0
        %545 = vmatpush.bf16.msra.mxu0 0
        %546 = vmatpush.bf16.msra.mxu0 0
        %547 = vmatpush.bf16.msra.mxu0 0
        %548 = vmatpush.bf16.msra.mxu0 %v539
        %549 = vmatmul.bf16.gmra.mxu0 %v536
        %v550 = vpop.f32.mrf.mxu0
        %v551 = vadd.f32 0.0, %v550
        %v552 = vpop.f32.mrf.mxu0
        %553 = vdwg.mxu0
        %v554 = vrcp.pop %v531
        %v555 = vmul.f32 %v551, %v554
        %557 = vrot.lane.b32.xlu0 %v443, 8
        %v558 = vpop.permute.xlu0 %557
        %561 = vrot.lane.b32.xlu0 %v499, 16
        %v562 = vpop.permute.xlu0 %561
        %565 = vrot.lane.b32.xlu0 %v555, 24
        %v566 = vpop.permute.xlu0 %565
        %v568 = vsel %vm334, %v387, %v558
        %vm569 = vcmask 130048
        %v570 = vsel %vm569, %v568, %v562
        %vm571 = vcmask 195584
        %v572 = vsel %vm571, %v570, %v566
        %v573 = vpack.c.bf16 %v572, %v572
        %s574 = smul.addr %s289, 4
        %s575 = scalar_lea.vmem [#allocation8], %s574
        %v576 = vld [vmem:[%s575] sm:$0xf]
        %v577 = vld [vmem:[%s575 + $0x4] sm:$0xf]
        %v578 = vld [vmem:[%s575 + $0x8] sm:$0xf]
        %v579 = vld [vmem:[%s575 + $0xc] sm:$0xf]
        %v584 = vunpack.c.l.b16 %v576
        %v585 = vunpack.c.l.b16 %v577
        %v586 = vunpack.c.l.b16 %v578
        %v587 = vunpack.c.l.b16 %v579
        %v588 = vpack.c.b16 %v585, %v584
        %v589 = vpack.c.b16 %v587, %v586
        %v593 = vsel %vm313, %v573, 0
        %595 = vmatpush.bf16.msra.mxu0 0
        %596 = vmatpush.bf16.msra.mxu0 0
        %597 = vmatpush.bf16.msra.mxu0 0
        %598 = vmatpush.bf16.msra.mxu0 0
        %599 = vmatpush.bf16.msra.mxu0 0
        %600 = vmatpush.bf16.msra.mxu0 0
        %601 = vmatpush.bf16.msra.mxu0 %v589
        %602 = vmatpush.bf16.msra.mxu0 %v588
        %603 = vmatmul.bf16.gmra.mxu0 %v593
        %v604 = vpop.f32.mrf.mxu0
        %v605 = vadd.f32 0.0, %v604
        %v606 = vpop.f32.mrf.mxu0
        %607 = vdwg.mxu0
        %p608 = scmp.eq.s32.totalorder %s28, 0
        // Predicated region
        $region53: #{tpu_custom_call.1} parent=39 // pred_check
          %p609 = pneg %p608
        $region54: #{tpu_custom_call.1} parent=39 // pred_check_branch
          %611 = sbr.rel (%p609) target = $region56
        $region55: #{tpu_custom_call.1} parent=39 // pred_region
          %612 = vst.msk [vmem:[#allocation2] sm:$0xff] %vm313, %v605
        $region56: #{tpu_custom_call.1} parent=39 // pred_fallthru
          _
        %p613 = scmp.gt.s32.totalorder %s28, 0
        // Predicated region
        $region57: #{tpu_custom_call.1} parent=39 // pred_check
          %p614 = pneg %p613
        $region58: #{tpu_custom_call.1} parent=39 // pred_check_branch
          %616 = sbr.rel (%p614) target = $region60
        $region59: #{tpu_custom_call.1} parent=39 // pred_region
          %v617 = vld [vmem:[#allocation2] sm:$0xff]
          %v618 = vadd.f32 %v617, %v605
          %619 = vst.msk [vmem:[#allocation2] sm:$0xff] %vm313, %v618
        $region60: #{tpu_custom_call.1} parent=39 // pred_fallthru
          _
        // Predicated region
        $region61: #{tpu_custom_call.1} parent=39 // pred_check
          %p620 = pneg %p608
        $region62: #{tpu_custom_call.1} parent=39 // pred_check_branch
          %622 = sbr.rel (%p620) target = $region64
        $region63: #{tpu_custom_call.1} parent=39 // pred_region
          %v623 = vld [vmem:[#allocation2] sm:$0xff]
          %v624 = vld [vmem:[%s4] sm:$0x1]
          %v626 = vperm.slane %v624, 0
          %v628 = vadd.f32 %v623, %v626
          %629 = vst.msk [vmem:[%s286] sm:$0xff] %vm313, %v628
        $region64: #{tpu_custom_call.1} parent=39 // pred_fallthru
          _
        %s630 = sand.u32 %s153, 1
        %s631 = scalar_lea.sflag [#allocation5], %s630
        %s632 = sand.u32 %s153, 1
        %s633 = smul.addr %s632, 8
        %s634 = scalar_lea.vmem [#allocation9], %s633
        // Predicated region
        $region65: #{tpu_custom_call.1} parent=39 // pred_check
          %p635 = pneg %p163
        $region66: #{tpu_custom_call.1} parent=39 // pred_check_branch
          %637 = sbr.rel (%p635) target = $region68
        $region67: #{tpu_custom_call.1} parent=39 // pred_region
          %639 = vsyncadd %s631, 0
          %s640 = smul.addr %s27, 8
          %s641 = scalar_lea.hbm %s5, %s640
          %s643 = sshll.u32 %s634, 4
          %s644 = int_to_ptr.vmem [resolvable:$true] %s643
          %s645 = sshll.u32 %s641, 4
          %s646 = int_to_ptr.hbm [resolvable:$true] %s645
          %648 = dma.vmem_to_hbm [thread:$0]  %s644, 128, %s646, %s631
        $region68: #{tpu_custom_call.1} parent=39 // pred_fallthru
          _
      $region40: #{tpu_custom_call.1} parent=5 // pred_fallthru
        _
      %p649 = scmp.le.s32.totalorder 2, %s18
      // Predicated region
      $region69: #{tpu_custom_call.1} parent=5 // pred_check
        %p650 = pneg %p649
      $region70: #{tpu_custom_call.1} parent=5 // pred_check_branch
        %652 = sbr.rel (%p650) target = $region72
      $region71: #{tpu_custom_call.1} parent=5 // pred_region
        %s653 = ssub.s32 %s18, 2
        // Predicated region
        $region73: #{tpu_custom_call.1} parent=71 // pred_check
          %p654 = pneg %p169
        $region74: #{tpu_custom_call.1} parent=71 // pred_check_branch
          %656 = sbr.rel (%p654) target = $region76
        $region75: #{tpu_custom_call.1} parent=71 // pred_region
          %s657 = sand.u32 %s154, 1
          %s658 = scalar_lea.sflag [#allocation5], %s657
          %s659 = sand.u32 %s154, 1
          %s660 = smul.addr %s659, 8
          %s661 = scalar_lea.vmem [#allocation9], %s660
          %663 = dma.done %s658, 128
        $region76: #{tpu_custom_call.1} parent=71 // pred_fallthru
          _
      $region72: #{tpu_custom_call.1} parent=5 // pred_fallthru
        _
    $region6: #{tpu_custom_call.1} parent=1 // loop_footer
      %s22 = sadd.s32 1, %s18
    $region7: #{tpu_custom_call.1} parent=1 // loop_footer_branch
      %17 = sbr.rel target = $region3
    $region8: #{tpu_custom_call.1} parent=1 // loop_exit
      _
    %664 = vsyncpa [#allocation4], 1
    %s665 = scalar_lea.sflag [#allocation4], 1
    %666 = vsyncpa %s665, 1
    %667 = vsyncpa [#allocation7], 1
    %668 = vsyncpa [#allocation5], 1
    %s669 = scalar_lea.sflag [#allocation5], 1
    %670 = vsyncpa %s669, 1

</llo_original>
